<compile_context>
chip_gen: v6e
topology: v6e:2x2x1
jax: 0.10.0
libtpu: 0.0.40
codegen_flags: <defaults>
</compile_context>

<pallas_src>
import functools

import jax
import jax.numpy as jnp
from jax.experimental import pallas as pl
from jax.experimental.pallas import tpu as pltpu


# ----------------------------------------------------------------------------
# Kernels
# ----------------------------------------------------------------------------
def _project_qkv(x_ref, wq_ref, wk_ref, wv_ref, scale):
    """Flattened q/k/v projections: one (bb*S, nx) @ (nx, nh) matmul each."""
    bb, S, nx = x_ref.shape
    nh = wq_ref.shape[1]
    x2d = x_ref[...].reshape(bb * S, nx)
    # Native-dtype MXU operands, f32 accumulation. Fold 1/sqrt(S) into q.
    q = (jnp.dot(x2d, wq_ref[...], preferred_element_type=jnp.float32)
         * scale).astype(x2d.dtype)
    k = jnp.dot(x2d, wk_ref[...],
                preferred_element_type=jnp.float32).astype(x2d.dtype)
    v = jnp.dot(x2d, wv_ref[...],
                preferred_element_type=jnp.float32).astype(x2d.dtype)
    return (q.reshape(bb, S, nh), k.reshape(bb, S, nh), v.reshape(bb, S, nh),
            bb, S, nh, x2d.dtype)


def _output_proj(ctx_f32, wo_ref, o_ref, bb, S, nh, in_dtype):
    """Flattened (bb*S, nh) @ (nh, nh) output projection."""
    ctx2d = ctx_f32.reshape(bb * S, nh).astype(in_dtype)
    out = jnp.dot(ctx2d, wo_ref[...], preferred_element_type=jnp.float32)
    o_ref[...] = out.reshape(bb, S, nh).astype(o_ref.dtype)


def _attention_kernel_fused(x_ref, wq_ref, wk_ref, wv_ref, wo_ref, o_ref, *,
                            scale):
    """Single KV tile: whole attention fused, no scratch."""
    q3, k3, v3, bb, S, nh, in_dtype = _project_qkv(x_ref, wq_ref, wk_ref,
                                                   wv_ref, scale)
    s = jnp.einsum('bqh,bkh->bqk', q3, k3, preferred_element_type=jnp.float32)
    m = jnp.max(s, axis=-1, keepdims=True)                 # XLU reduce
    p = jnp.exp(s - m)                                     # EUP
    denom = jnp.sum(p, axis=-1, keepdims=True)             # XLU reduce
    # Normalize the (bb,S,nh) context instead of the (bb,S,S) probabilities.
    ctx = jnp.einsum('bqk,bkh->bqh', p.astype(v3.dtype), v3,
                     preferred_element_type=jnp.float32)
    ctx = ctx * pl.reciprocal(denom, approx=True)          # EUP vrcp
    _output_proj(ctx, wo_ref, o_ref, bb, S, nh, in_dtype)


def _attention_kernel_flash(x_ref, wq_ref, wk_ref, wv_ref, wo_ref, o_ref,
                            k_scr, v_scr, acc_scr, m_scr, l_scr, *,
                            scale, kv_block):
    """KV-tiled online-softmax path (flash-style) for larger S."""
    q3, k3, v3, bb, S, nh, in_dtype = _project_qkv(x_ref, wq_ref, wk_ref,
                                                   wv_ref, scale)
    k_scr[...] = k3
    v_scr[...] = v3
    m_scr[...] = jnp.full(m_scr.shape, -jnp.inf, dtype=jnp.float32)
    l_scr[...] = jnp.zeros(l_scr.shape, dtype=jnp.float32)
    acc_scr[...] = jnp.zeros(acc_scr.shape, dtype=jnp.float32)

    num_kv = S // kv_block

    @pl.loop(0, num_kv)
    def _(t):
        off = pl.multiple_of(t * kv_block, kv_block)
        k_t = k_scr[:, pl.ds(off, kv_block), :]
        v_t = v_scr[:, pl.ds(off, kv_block), :]
        s = jnp.einsum('bqh,bkh->bqk', q3, k_t,
                       preferred_element_type=jnp.float32)
        m_new = jnp.maximum(m_scr[...], jnp.max(s, axis=-1, keepdims=True))
        alpha = jnp.exp(m_scr[...] - m_new)
        p = jnp.exp(s - m_new)
        l_scr[...] = alpha * l_scr[...] + jnp.sum(p, axis=-1, keepdims=True)
        acc_scr[...] = alpha * acc_scr[...] + jnp.einsum(
            'bqk,bkh->bqh', p.astype(v_t.dtype), v_t,
            preferred_element_type=jnp.float32)
        m_scr[...] = m_new

    ctx = acc_scr[...] * pl.reciprocal(l_scr[...], approx=True)
    _output_proj(ctx, wo_ref, o_ref, bb, S, nh, in_dtype)


# ----------------------------------------------------------------------------
# Sizing heuristics
# ----------------------------------------------------------------------------
def _device_budget():
    """(vmem_limit_bytes, min_grid_steps) per TPU generation."""
    kind = ""
    try:
        kind = jax.devices()[0].device_kind.lower()
    except Exception:
        pass
    if "v7" in kind:
        # v7x: 64 MiB physical VMEM per TC, 2 TCs/chip -> want >= 2 grid steps.
        return 48 * 1024 * 1024, 2
    # v5e / v6e: 128 MiB physical VMEM, single TensorCore -> biggest block wins.
    return 100 * 1024 * 1024, 1


def _pick_kv_block(S, max_block=512):
    if S <= max_block:
        return S
    best = None
    for blk in range(max_block, 0, -1):
        if S % blk == 0:
            if blk % 128 == 0:
                return blk
            if best is None:
                best = blk
    return best if best is not None else S


def _pick_batch_block(B, S, nx, nh, kv_block, itemsize, budget, min_steps):
    db = itemsize
    weight_bytes = 2 * (3 * nx * nh + nh * nh) * db     # double-buffered weights

    def footprint(bb):
        io = 2 * bb * S * (nx + nh) * db                # double-buffered x / out tiles
        qkv = 3 * bb * S * nh * (db + 4)                # q/k/v (f32 matmul result + cast)
        scr = bb * S * (2 * nh * db + 4 * nh + 8)       # k/v scratch, f32 acc, m/l
        scores = 2 * bb * S * kv_block * 4              # s and p tiles (f32)
        return weight_bytes + io + qkv + scr + scores

    bb = max(1, B // max(min_steps, 1))
    while bb > 1 and (B % bb != 0 or footprint(bb) > budget):
        bb -= 1
    return int(bb)


# ----------------------------------------------------------------------------
# Wrapper
# ----------------------------------------------------------------------------
def attention_layer(x, wq, wk, wv, wo, *, batch_block=None, kv_block=None,
                    vmem_limit_bytes=None):
    """AttentionLayer forward.

    x:  (batch, seq, nx)
    wq, wk, wv: (nx, nh)   -- pre-transposed nn.Linear weights (W.T)
    wo: (nh, nh)           -- pre-transposed nn.Linear weight (W.T)
    returns (batch, seq, nh)
    """
    B, S, nx = x.shape
    nh = wq.shape[1]
    assert wq.shape == (nx, nh) and wk.shape == (nx, nh) and wv.shape == (nx, nh)
    assert wo.shape == (nh, nh)

    dev_limit, min_steps = _device_budget()
    if vmem_limit_bytes is None:
        vmem_limit_bytes = dev_limit
    budget = int(vmem_limit_bytes * 0.85)

    if kv_block is None:
        kv_block = _pick_kv_block(S)
    assert S % kv_block == 0, "seq must be divisible by kv_block"

    itemsize = jnp.dtype(x.dtype).itemsize
    if batch_block is None:
        batch_block = _pick_batch_block(B, S, nx, nh, kv_block, itemsize,
                                        budget, min_steps)
    assert B % batch_block == 0, "batch must be divisible by batch_block"

    # The PyTorch module scales by 1/sqrt(q.shape[1]) == 1/sqrt(seq_len).
    scale = 1.0 / float(S) ** 0.5
    num_kv = S // kv_block
    grid = (B // batch_block,)

    in_specs = [
        pl.BlockSpec((batch_block, S, nx), lambda b: (b, 0, 0)),  # x
        pl.BlockSpec((nx, nh), lambda b: (0, 0)),                 # W_q
        pl.BlockSpec((nx, nh), lambda b: (0, 0)),                 # W_k
        pl.BlockSpec((nx, nh), lambda b: (0, 0)),                 # W_v
        pl.BlockSpec((nh, nh), lambda b: (0, 0)),                 # W_o
    ]
    # TODO(synk): nh < 128 (tiny test) makes the output last dim non-lane-dense;
    # real hidden sizes should be multiples of 128.
    out_spec = pl.BlockSpec((batch_block, S, nh), lambda b: (b, 0, 0))

    if num_kv == 1:
        kernel = functools.partial(_attention_kernel_fused, scale=scale)
        scratch = []
    else:
        kernel = functools.partial(_attention_kernel_flash, scale=scale,
                                   kv_block=kv_block)
        scratch = [
            pltpu.VMEM((batch_block, S, nh), x.dtype),      # k
            pltpu.VMEM((batch_block, S, nh), x.dtype),      # v
            pltpu.VMEM((batch_block, S, nh), jnp.float32),  # acc
            pltpu.VMEM((batch_block, S, 1), jnp.float32),   # m
            pltpu.VMEM((batch_block, S, 1), jnp.float32),   # l
        ]

    flops = 2 * B * S * (3 * nx * nh + nh * nh + 2 * S * nh)
    bytes_accessed = (B * S * nx + 3 * nx * nh + nh * nh + B * S * nh) * itemsize
    cost = pl.CostEstimate(flops=int(flops), transcendentals=int(B * S * S),
                           bytes_accessed=int(bytes_accessed))

    return pl.pallas_call(
        kernel,
        out_shape=jax.ShapeDtypeStruct((B, S, nh), x.dtype),
        grid_spec=pltpu.PrefetchScalarGridSpec(
            num_scalar_prefetch=0,
            grid=grid,
            in_specs=in_specs,
            out_specs=out_spec,
            scratch_shapes=scratch,
        ),
        compiler_params=pltpu.CompilerParams(
            dimension_semantics=("parallel",),
            vmem_limit_bytes=int(vmem_limit_bytes),
        ),
        cost_estimate=cost,
    )(x, wq, wk, wv, wo)


# ----------------------------------------------------------------------------
# Self-test
# ----------------------------------------------------------------------------
if __name__ == "__main__":
    def reference(x, wq, wk, wv, wo):
        q = x @ wq
        k = x @ wk
        v = x @ wv
        d = q.shape[1]  # == seq_len, matching the module's q.shape[1] quirk
        score = jnp.einsum('bqh,bkh->bqk', q, k) / (float(d) ** 0.5)
        attn = jax.nn.softmax(score, axis=-1)  # ones-mask multiply is a no-op
        return jnp.einsum('bqk,bkh->bqh', attn, v) @ wo

    def make_inputs(key, batch, seq, nx, nh):
        kx, kq, kk, kv_, ko = jax.random.split(key, 5)
        x = jax.random.normal(kx, (batch, seq, nx), dtype=jnp.float32)
        # Weights stored (in_features, out_features) == torch weight transposed.
        wq = jax.random.normal(kq, (nx, nh), dtype=jnp.float32) * (1.0 / nx ** 0.5)
        wk = jax.random.normal(kk, (nx, nh), dtype=jnp.float32) * (1.0 / nx ** 0.5)
        wv = jax.random.normal(kv_, (nx, nh), dtype=jnp.float32) * (1.0 / nx ** 0.5)
        wo = jax.random.normal(ko, (nh, nh), dtype=jnp.float32) * (1.0 / nh ** 0.5)
        return x, wq, wk, wv, wo

    key = jax.random.PRNGKey(0)
    k1, k2 = jax.random.split(key)

    # 1) Module-sized small shapes: single-KV-tile fully-fused path.
    x, wq, wk, wv, wo = make_inputs(k1, 2, 8, 32, 32)
    out = jax.block_until_ready(attention_layer(x, wq, wk, wv, wo))
    ref = reference(x, wq, wk, wv, wo)
    assert out.shape == ref.shape
    err = float(jnp.max(jnp.abs(out - ref)))
    assert jnp.allclose(out, ref, atol=2e-3, rtol=2e-3), f"fused path mismatch: {err}"

    # 2) Larger lane-dense shapes: exercises the KV-tiled online-softmax path.
    x, wq, wk, wv, wo = make_inputs(k2, 2, 256, 128, 128)
    out = jax.block_until_ready(attention_layer(x, wq, wk, wv, wo, kv_block=128))
    ref = reference(x, wq, wk, wv, wo)
    err = float(jnp.max(jnp.abs(out - ref)))
    assert jnp.allclose(out, ref, atol=2e-3, rtol=2e-3), f"flash path mismatch: {err}"

    print("KERNEL_OK")
</pallas_src>

<mosaic_0001>
module attributes {stable_mosaic.version = 11 : i64} {
  func.func @_attention_kernel_fused(%arg0: i32, %arg1: memref<2x8x32xf32, #tpu.memory_space<vmem>>, %arg2: memref<32x32xf32, #tpu.memory_space<vmem>>, %arg3: memref<32x32xf32, #tpu.memory_space<vmem>>, %arg4: memref<32x32xf32, #tpu.memory_space<vmem>>, %arg5: memref<32x32xf32, #tpu.memory_space<vmem>>, %arg6: memref<2x8x32xf32, #tpu.memory_space<vmem>>) attributes {dimension_semantics = [#tpu.dimension_semantics<parallel>], iteration_bounds = array<i64: 1>, scalar_prefetch = 0 : i64, scratch_operands = 0 : i64, tpu.core_type = #tpu.core_type<tc>, window_params = [{transform_indices = @transform_0, window_bounds = array<i64: 2, 8, 32>}, {pipeline_mode = #tpu.pipeline_mode<synchronous>, transform_indices = @transform_1, window_bounds = array<i64: 32, 32>}, {pipeline_mode = #tpu.pipeline_mode<synchronous>, transform_indices = @transform_2, window_bounds = array<i64: 32, 32>}, {pipeline_mode = #tpu.pipeline_mode<synchronous>, transform_indices = @transform_3, window_bounds = array<i64: 32, 32>}, {pipeline_mode = #tpu.pipeline_mode<synchronous>, transform_indices = @transform_4, window_bounds = array<i64: 32, 32>}, {transform_indices = @transform_5, window_bounds = array<i64: 2, 8, 32>}]} {
    %c0 = arith.constant 0 : index
    %c0_0 = arith.constant 0 : index
    %c0_1 = arith.constant 0 : index
    %0 = vector.load %arg1[%c0, %c0_0, %c0_1] : memref<2x8x32xf32, #tpu.memory_space<vmem>>, vector<2x8x32xf32>
    %1 = vector.shape_cast %0 : vector<2x8x32xf32> to vector<16x32xf32>
    %c0_2 = arith.constant 0 : index
    %c0_3 = arith.constant 0 : index
    %2 = vector.load %arg2[%c0_2, %c0_3] : memref<32x32xf32, #tpu.memory_space<vmem>>, vector<32x32xf32>
    %cst = arith.constant dense<0.000000e+00> : vector<16x32xf32>
    %3 = tpu.matmul %1, %2, %cst {dimension_numbers = #tpu.dot_dimension_numbers<[1], [0], [0], [1], [0, 0, 1, 1], [], []>} : vector<16x32xf32>, vector<32x32xf32>, vector<16x32xf32> -> vector<16x32xf32>
    %cst_4 = arith.constant 0.353553385 : f32
    %4 = vector.broadcast %cst_4 : f32 to vector<16x32xf32>
    %5 = arith.mulf %3, %4 : vector<16x32xf32>
    %c0_5 = arith.constant 0 : index
    %c0_6 = arith.constant 0 : index
    %6 = vector.load %arg3[%c0_5, %c0_6] : memref<32x32xf32, #tpu.memory_space<vmem>>, vector<32x32xf32>
    %cst_7 = arith.constant dense<0.000000e+00> : vector<16x32xf32>
    %7 = tpu.matmul %1, %6, %cst_7 {dimension_numbers = #tpu.dot_dimension_numbers<[1], [0], [0], [1], [0, 0, 1, 1], [], []>} : vector<16x32xf32>, vector<32x32xf32>, vector<16x32xf32> -> vector<16x32xf32>
    %c0_8 = arith.constant 0 : index
    %c0_9 = arith.constant 0 : index
    %8 = vector.load %arg4[%c0_8, %c0_9] : memref<32x32xf32, #tpu.memory_space<vmem>>, vector<32x32xf32>
    %cst_10 = arith.constant dense<0.000000e+00> : vector<16x32xf32>
    %9 = tpu.matmul %1, %8, %cst_10 {dimension_numbers = #tpu.dot_dimension_numbers<[1], [0], [0], [1], [0, 0, 1, 1], [], []>} : vector<16x32xf32>, vector<32x32xf32>, vector<16x32xf32> -> vector<16x32xf32>
    %10 = vector.shape_cast %5 : vector<16x32xf32> to vector<2x8x32xf32>
    %11 = vector.shape_cast %7 : vector<16x32xf32> to vector<2x8x32xf32>
    %12 = vector.shape_cast %9 : vector<16x32xf32> to vector<2x8x32xf32>
    "tpu.trace_start"() <{level = 10 : i32, message = "bqh,bkh->bqk"}> : () -> ()
    %cst_11 = arith.constant dense<0.000000e+00> : vector<2x8x8xf32>
    %13 = tpu.matmul %10, %11, %cst_11 {dimension_numbers = #tpu.dot_dimension_numbers<[2], [2], [1], [1], [0, 0, 0, 1, 1, 1], [0], [0]>} : vector<2x8x32xf32>, vector<2x8x32xf32>, vector<2x8x8xf32> -> vector<2x8x8xf32>
    "tpu.trace_stop"() : () -> ()
    %cst_12 = arith.constant dense<0xFF800000> : vector<2x8xf32>
    %14 = vector.multi_reduction <maximumf>, %13, %cst_12 [2] : vector<2x8x8xf32> to vector<2x8xf32>
    %15 = vector.shape_cast %14 : vector<2x8xf32> to vector<2x8x1xf32>
    %16 = vector.broadcast %15 : vector<2x8x1xf32> to vector<2x8x8xf32>
    %17 = arith.subf %13, %16 : vector<2x8x8xf32>
    %18 = math.exp %17 : vector<2x8x8xf32>
    %cst_13 = arith.constant dense<0.000000e+00> : vector<2x8xf32>
    %19 = vector.multi_reduction <add>, %18, %cst_13 [2] : vector<2x8x8xf32> to vector<2x8xf32>
    %20 = vector.shape_cast %19 : vector<2x8xf32> to vector<2x8x1xf32>
    "tpu.trace_start"() <{level = 10 : i32, message = "bqk,bkh->bqh"}> : () -> ()
    %cst_14 = arith.constant dense<0.000000e+00> : vector<2x8x32xf32>
    %21 = tpu.matmul %18, %12, %cst_14 {dimension_numbers = #tpu.dot_dimension_numbers<[2], [1], [1], [2], [0, 0, 0, 1, 1, 2], [0], [0]>} : vector<2x8x8xf32>, vector<2x8x32xf32>, vector<2x8x32xf32> -> vector<2x8x32xf32>
    "tpu.trace_stop"() : () -> ()
    %22 = tpu.reciprocal %20 {approx = true} : vector<2x8x1xf32> -> vector<2x8x1xf32>
    %23 = vector.broadcast %22 : vector<2x8x1xf32> to vector<2x8x32xf32>
    %24 = arith.mulf %21, %23 : vector<2x8x32xf32>
    %25 = vector.shape_cast %24 : vector<2x8x32xf32> to vector<16x32xf32>
    %c0_15 = arith.constant 0 : index
    %c0_16 = arith.constant 0 : index
    %26 = vector.load %arg5[%c0_15, %c0_16] : memref<32x32xf32, #tpu.memory_space<vmem>>, vector<32x32xf32>
    %cst_17 = arith.constant dense<0.000000e+00> : vector<16x32xf32>
    %27 = tpu.matmul %25, %26, %cst_17 {dimension_numbers = #tpu.dot_dimension_numbers<[1], [0], [0], [1], [0, 0, 1, 1], [], []>} : vector<16x32xf32>, vector<32x32xf32>, vector<16x32xf32> -> vector<16x32xf32>
    %28 = vector.shape_cast %27 : vector<16x32xf32> to vector<2x8x32xf32>
    %c0_18 = arith.constant 0 : index
    %c0_19 = arith.constant 0 : index
    %c0_20 = arith.constant 0 : index
    %29 = vector.load %arg6[%c0_18, %c0_19, %c0_20] : memref<2x8x32xf32, #tpu.memory_space<vmem>>, vector<2x8x32xf32>
    tpu.vector_store %arg6[%c0_18, %c0_19, %c0_20], %28 {strides = array<i32>} : memref<2x8x32xf32, #tpu.memory_space<vmem>>, vector<2x8x32xf32>,
    return
  }
  func.func @transform_0(%arg0: i32) -> (i32, i32, i32) {
    %c0_i32 = arith.constant 0 : i32
    %c0_i32_0 = arith.constant 0 : i32
    %c0_i32_1 = arith.constant 0 : i32
    return %arg0, %c0_i32, %c0_i32_0 : i32, i32, i32
  }
  func.func @transform_1(%arg0: i32) -> (i32, i32) {
    %c0_i32 = arith.constant 0 : i32
    %c0_i32_0 = arith.constant 0 : i32
    %c0_i32_1 = arith.constant 0 : i32
    return %c0_i32, %c0_i32_0 : i32, i32
  }
  func.func @transform_2(%arg0: i32) -> (i32, i32) {
    %c0_i32 = arith.constant 0 : i32
    %c0_i32_0 = arith.constant 0 : i32
    %c0_i32_1 = arith.constant 0 : i32
    return %c0_i32, %c0_i32_0 : i32, i32
  }
  func.func @transform_3(%arg0: i32) -> (i32, i32) {
    %c0_i32 = arith.constant 0 : i32
    %c0_i32_0 = arith.constant 0 : i32
    %c0_i32_1 = arith.constant 0 : i32
    return %c0_i32, %c0_i32_0 : i32, i32
  }
  func.func @transform_4(%arg0: i32) -> (i32, i32) {
    %c0_i32 = arith.constant 0 : i32
    %c0_i32_0 = arith.constant 0 : i32
    %c0_i32_1 = arith.constant 0 : i32
    return %c0_i32, %c0_i32_0 : i32, i32
  }
  func.func @transform_5(%arg0: i32) -> (i32, i32, i32) {
    %c0_i32 = arith.constant 0 : i32
    %c0_i32_0 = arith.constant 0 : i32
    %c0_i32_1 = arith.constant 0 : i32
    return %arg0, %c0_i32, %c0_i32_0 : i32, i32, i32
  }
}

</mosaic_0001>

<llo_original>
// kernel: tpu_custom_call.1
$region0: #{tpu_custom_call.1}
  #allocation0 [shape = 'u32[]', space=smem, size = 0x4, offset = 0x4, fixed_abs, tag = 'smem constant byte address 0x4 - core index']
  #allocation1 [shape = 'u32[144,128]{1,0:T(1,128)}', space=vmem, size = 0x12000, scoped, tag = 'internal scratch']
  %s0 = inlined_call_operand.hbm [shape: f32[2,8,32], index: 0, kind: input, shape index: {}]
  %s1 = inlined_call_operand.hbm [shape: f32[32,32], index: 1, kind: input, shape index: {}]
  %s2 = inlined_call_operand.hbm [shape: f32[32,32], index: 2, kind: input, shape index: {}]
  %s3 = inlined_call_operand.hbm [shape: f32[32,32], index: 3, kind: input, shape index: {}]
  %s4 = inlined_call_operand.hbm [shape: f32[32,32], index: 4, kind: input, shape index: {}]
  %s5 = inlined_call_operand.hbm [shape: f32[2,8,32], index: 5, kind: output, shape index: {}]
  %s6 = sld [smem:[#allocation0]]
  $region50: #{tpu_custom_call.1} parent=0
    _
  %s8 = ssub.s32 1, %s6
  %s9 = scalar_select 0, %s8, %s6
  $region1: #{tpu_custom_call.1} parent=0
    #allocation2 [shape = 'u8[8192]{0}', space=vmem, size = 0x2000, scoped, tag = 'input window, operand 0, single buffered']
    #allocation3 [shape = 's32[1]{0}', space=sflag, size = 0x4, scoped, tag = 'scoped memory for tpu_custom_call.1']
    #allocation4 [shape = 's32[1]{0}', space=sflag, size = 0x4, scoped, tag = 'scoped memory for tpu_custom_call.1']
    #allocation5 [shape = 'u8[16384]{0}', space=vmem, size = 0x4000, scoped, tag = 'input window, operand 1, single buffered']
    #allocation6 [shape = 's32[1]{0}', space=sflag, size = 0x4, scoped, tag = 'scoped memory for tpu_custom_call.1']
    #allocation7 [shape = 'u8[16384]{0}', space=vmem, size = 0x4000, scoped, tag = 'input window, operand 2, single buffered']
    #allocation8 [shape = 'u8[16384]{0}', space=vmem, size = 0x4000, scoped, tag = 'input window, operand 3, single buffered']
    #allocation9 [shape = 's32[1]{0}', space=sflag, size = 0x4, scoped, tag = 'scoped memory for tpu_custom_call.1']
    #allocation10 [shape = 'u8[16384]{0}', space=vmem, size = 0x4000, scoped, tag = 'input window, operand 4, single buffered']
    #allocation11 [shape = 'u8[8192]{0}', space=vmem, size = 0x2000, scoped, tag = 'output window, operand 0, single buffered']
    %10 = vsyncpa [#allocation3], 0
    %11 = vsyncpa [#allocation6], 0
    %12 = vsyncpa [#allocation9], 0
    %13 = vsyncpa [#allocation4], 0
    // Predicated region
    $region2: #{tpu_custom_call.1} parent=1 // pred_check
      _
    $region3: #{tpu_custom_call.1} parent=1 // pred_check_branch
      %15 = sbr.rel (0) target = $region5
    $region4: #{tpu_custom_call.1} parent=1 // pred_region
      %s17 = ssub.s32 256, 256
      %18 = vsyncadd [#allocation3], %s17
      %s19 = sshll.u32 [#allocation2], 4
      %s20 = int_to_ptr.vmem [resolvable:$true] %s19
      %25 = dma.hbm_to_vmem [thread:$0]  %s0, 256, %s20, [#allocation3], 128, 128, 8
    $region5: #{tpu_custom_call.1} parent=1 // pred_fallthru
      _
    // Predicated region
    $region6: #{tpu_custom_call.1} parent=1 // pred_check
      _
    $region7: #{tpu_custom_call.1} parent=1 // pred_check_branch
      %27 = sbr.rel (0) target = $region9
    $region8: #{tpu_custom_call.1} parent=1 // pred_region
      %s29 = ssub.s32 512, 512
      %30 = vsyncadd [#allocation6], %s29
      %s31 = sshll.u32 [#allocation5], 4
      %s32 = int_to_ptr.vmem [resolvable:$true] %s31
      %37 = dma.hbm_to_vmem [thread:$0]  %s1, 512, %s32, [#allocation6], 128, 128, 8
    $region9: #{tpu_custom_call.1} parent=1 // pred_fallthru
      _
    // Predicated region
    $region10: #{tpu_custom_call.1} parent=1 // pred_check
      _
    $region11: #{tpu_custom_call.1} parent=1 // pred_check_branch
      %39 = sbr.rel (0) target = $region13
    $region12: #{tpu_custom_call.1} parent=1 // pred_region
      %s41 = ssub.s32 512, 512
      %42 = vsyncadd [#allocation6], %s41
      %s43 = sshll.u32 [#allocation7], 4
      %s44 = int_to_ptr.vmem [resolvable:$true] %s43
      %49 = dma.hbm_to_vmem [thread:$0]  %s2, 512, %s44, [#allocation6], 128, 128, 8
    $region13: #{tpu_custom_call.1} parent=1 // pred_fallthru
      _
    // Predicated region
    $region14: #{tpu_custom_call.1} parent=1 // pred_check
      _
    $region15: #{tpu_custom_call.1} parent=1 // pred_check_branch
      %51 = sbr.rel (0) target = $region17
    $region16: #{tpu_custom_call.1} parent=1 // pred_region
      %s53 = ssub.s32 512, 512
      %54 = vsyncadd [#allocation9], %s53
      %s55 = sshll.u32 [#allocation8], 4
      %s56 = int_to_ptr.vmem [resolvable:$true] %s55
      %61 = dma.hbm_to_vmem [thread:$0]  %s3, 512, %s56, [#allocation9], 128, 128, 8
    $region17: #{tpu_custom_call.1} parent=1 // pred_fallthru
      _
    // Predicated region
    $region18: #{tpu_custom_call.1} parent=1 // pred_check
      _
    $region19: #{tpu_custom_call.1} parent=1 // pred_check_branch
      %63 = sbr.rel (0) target = $region21
    $region20: #{tpu_custom_call.1} parent=1 // pred_region
      %s65 = ssub.s32 512, 512
      %66 = vsyncadd [#allocation9], %s65
      %s67 = sshll.u32 [#allocation10], 4
      %s68 = int_to_ptr.vmem [resolvable:$true] %s67
      %73 = dma.hbm_to_vmem [thread:$0]  %s4, 512, %s68, [#allocation9], 128, 128, 8
    $region21: #{tpu_custom_call.1} parent=1 // pred_fallthru
      _
    // Predicated region
    $region22: #{tpu_custom_call.1} parent=1 // pred_check
      _
    $region23: #{tpu_custom_call.1} parent=1 // pred_check_branch
      %75 = sbr.rel (0) target = $region25
    $region24: #{tpu_custom_call.1} parent=1 // pred_region
      %76 = dma.done [#allocation3], 256
    $region25: #{tpu_custom_call.1} parent=1 // pred_fallthru
      _
    // Predicated region
    $region26: #{tpu_custom_call.1} parent=1 // pred_check
      _
    $region27: #{tpu_custom_call.1} parent=1 // pred_check_branch
      %78 = sbr.rel (0) target = $region29
    $region28: #{tpu_custom_call.1} parent=1 // pred_region
      %79 = dma.done [#allocation6], 512
    $region29: #{tpu_custom_call.1} parent=1 // pred_fallthru
      _
    // Predicated region
    $region30: #{tpu_custom_call.1} parent=1 // pred_check
      _
    $region31: #{tpu_custom_call.1} parent=1 // pred_check_branch
      %81 = sbr.rel (0) target = $region33
    $region32: #{tpu_custom_call.1} parent=1 // pred_region
      %82 = dma.done [#allocation6], 512
    $region33: #{tpu_custom_call.1} parent=1 // pred_fallthru
      _
    // Predicated region
    $region34: #{tpu_custom_call.1} parent=1 // pred_check
      _
    $region35: #{tpu_custom_call.1} parent=1 // pred_check_branch
      %84 = sbr.rel (0) target = $region37
    $region36: #{tpu_custom_call.1} parent=1 // pred_region
      %85 = dma.done [#allocation9], 512
    $region37: #{tpu_custom_call.1} parent=1 // pred_fallthru
      _
    // Predicated region
    $region38: #{tpu_custom_call.1} parent=1 // pred_check
      _
    $region39: #{tpu_custom_call.1} parent=1 // pred_check_branch
      %87 = sbr.rel (0) target = $region41
    $region40: #{tpu_custom_call.1} parent=1 // pred_region
      %88 = dma.done [#allocation9], 512
    $region41: #{tpu_custom_call.1} parent=1 // pred_fallthru
      _
    %v89 = vld [vmem:[#allocation2] sm:$0xff]
    %v90 = vld [vmem:[#allocation2 + $0x8] sm:$0xff]
    %v91 = vld [vmem:[#allocation5] sm:$0xff]
    %v92 = vld [vmem:[#allocation5 + $0x8] sm:$0xff]
    %v93 = vld [vmem:[#allocation5 + $0x10] sm:$0xff]
    %v94 = vld [vmem:[#allocation5 + $0x18] sm:$0xff]
    %vm95 = vcmask 261120
    %v97 = vsel %vm95, %v89, 0
    %v100 = vsel %vm95, %v90, 0
    %102 = vmatprep.subr.mxu0 0.0
    %103 = vmatpush1.msra.mxu0 0.0
    %104 = vmatprep.subr.mxu0 0.0
    %105 = vmatpush1.msra.mxu0 0.0
    %106 = vmatprep.subr.mxu0 0.0
    %107 = vmatpush1.msra.mxu0 0.0
    %108 = vmatprep.subr.mxu0 0.0
    %109 = vmatpush1.msra.mxu0 0.0
    %110 = vmatprep.subr.mxu0 0.0
    %111 = vmatpush1.msra.mxu0 0.0
    %112 = vmatprep.subr.mxu0 0.0
    %113 = vmatpush1.msra.mxu0 0.0
    %114 = vmatprep.subr.mxu0 0.0
    %115 = vmatpush1.msra.mxu0 0.0
    %116 = vmatprep.subr.mxu0 0.0
    %117 = vmatpush1.msra.mxu0 0.0
    %118 = vmatprep.subr.mxu0 0.0
    %119 = vmatpush1.msra.mxu0 0.0
    %120 = vmatprep.subr.mxu0 0.0
    %121 = vmatpush1.msra.mxu0 0.0
    %122 = vmatprep.subr.mxu0 0.0
    %123 = vmatpush1.msra.mxu0 0.0
    %124 = vmatprep.subr.mxu0 0.0
    %125 = vmatpush1.msra.mxu0 0.0
    %126 = vmatprep.subr.mxu0 0.0
    %127 = vmatpush1.msra.mxu0 %v94
    %128 = vmatprep.subr.mxu0 0.0
    %129 = vmatpush1.msra.mxu0 %v93
    %130 = vmatprep.subr.mxu0 0.0
    %131 = vmatpush1.msra.mxu0 %v92
    %132 = vmatprep.subr.mxu0 0.0
    %133 = vmatpush1.msra.mxu0 %v91
    %134 = vmatprep.subr.mxu0 0.0
    %135 = vmatpush2.msra.mxu0 0.0
    %136 = vmatprep.subr.mxu0 0.0
    %137 = vmatpush2.msra.mxu0 0.0
    %138 = vmatprep.subr.mxu0 0.0
    %139 = vmatpush2.msra.mxu0 0.0
    %140 = vmatprep.subr.mxu0 0.0
    %141 = vmatpush2.msra.mxu0 0.0
    %142 = vmatprep.subr.mxu0 0.0
    %143 = vmatpush2.msra.mxu0 0.0
    %144 = vmatprep.subr.mxu0 0.0
    %145 = vmatpush2.msra.mxu0 0.0
    %146 = vmatprep.subr.mxu0 0.0
    %147 = vmatpush2.msra.mxu0 0.0
    %148 = vmatprep.subr.mxu0 0.0
    %149 = vmatpush2.msra.mxu0 0.0
    %150 = vmatprep.subr.mxu0 0.0
    %151 = vmatpush2.msra.mxu0 0.0
    %152 = vmatprep.subr.mxu0 0.0
    %153 = vmatpush2.msra.mxu0 0.0
    %154 = vmatprep.subr.mxu0 0.0
    %155 = vmatpush2.msra.mxu0 0.0
    %156 = vmatprep.subr.mxu0 0.0
    %157 = vmatpush2.msra.mxu0 0.0
    %158 = vmatprep.subr.mxu0 0.0
    %159 = vmatpush2.msra.mxu0 0.0
    %160 = vmatprep.subr.mxu0 0.0
    %161 = vmatpush2.msra.mxu0 0.0
    %162 = vmatprep.subr.mxu0 0.0
    %163 = vmatpush2.msra.mxu0 0.0
    %164 = vmatprep.subr.mxu0 0.0
    %165 = vmatpush2.msra.mxu0 0.0
    %166 = vmatprep.mubr.f32.mxu0 0.0
    %167 = vmatmul.mubr.f32.gmra.mxu0 %v97
    %v168 = vpop.f32.mrf.mxu0
    %v169 = vadd.f32 0.0, %v168
    %v170 = vpop.f32.mrf.mxu0
    %171 = vmatprep.mubr.f32.mxu0 0.0
    %172 = vmatmul.mubr.f32.gmra.mxu0 %v100
    %v173 = vpop.f32.mrf.mxu0
    %v174 = vadd.f32 0.0, %v173
    %v175 = vpop.f32.mrf.mxu0
    %176 = vdwg.mxu0
    %v177 = vmul.f32 %v169, 0.35355338
    %v178 = vmul.f32 %v174, 0.35355338
    %v179 = vld [vmem:[#allocation7] sm:$0xff]
    %v180 = vld [vmem:[#allocation7 + $0x8] sm:$0xff]
    %v181 = vld [vmem:[#allocation7 + $0x10] sm:$0xff]
    %v182 = vld [vmem:[#allocation7 + $0x18] sm:$0xff]
    %183 = vmatprep.subr.mxu0 0.0
    %184 = vmatpush1.msra.mxu0 0.0
    %185 = vmatprep.subr.mxu0 0.0
    %186 = vmatpush1.msra.mxu0 0.0
    %187 = vmatprep.subr.mxu0 0.0
    %188 = vmatpush1.msra.mxu0 0.0
    %189 = vmatprep.subr.mxu0 0.0
    %190 = vmatpush1.msra.mxu0 0.0
    %191 = vmatprep.subr.mxu0 0.0
    %192 = vmatpush1.msra.mxu0 0.0
    %193 = vmatprep.subr.mxu0 0.0
    %194 = vmatpush1.msra.mxu0 0.0
    %195 = vmatprep.subr.mxu0 0.0
    %196 = vmatpush1.msra.mxu0 0.0
    %197 = vmatprep.subr.mxu0 0.0
    %198 = vmatpush1.msra.mxu0 0.0
    %199 = vmatprep.subr.mxu0 0.0
    %200 = vmatpush1.msra.mxu0 0.0
    %201 = vmatprep.subr.mxu0 0.0
    %202 = vmatpush1.msra.mxu0 0.0
    %203 = vmatprep.subr.mxu0 0.0
    %204 = vmatpush1.msra.mxu0 0.0
    %205 = vmatprep.subr.mxu0 0.0
    %206 = vmatpush1.msra.mxu0 0.0
    %207 = vmatprep.subr.mxu0 0.0
    %208 = vmatpush1.msra.mxu0 %v182
    %209 = vmatprep.subr.mxu0 0.0
    %210 = vmatpush1.msra.mxu0 %v181
    %211 = vmatprep.subr.mxu0 0.0
    %212 = vmatpush1.msra.mxu0 %v180
    %213 = vmatprep.subr.mxu0 0.0
    %214 = vmatpush1.msra.mxu0 %v179
    %215 = vmatprep.subr.mxu0 0.0
    %216 = vmatpush2.msra.mxu0 0.0
    %217 = vmatprep.subr.mxu0 0.0
    %218 = vmatpush2.msra.mxu0 0.0
    %219 = vmatprep.subr.mxu0 0.0
    %220 = vmatpush2.msra.mxu0 0.0
    %221 = vmatprep.subr.mxu0 0.0
    %222 = vmatpush2.msra.mxu0 0.0
    %223 = vmatprep.subr.mxu0 0.0
    %224 = vmatpush2.msra.mxu0 0.0
    %225 = vmatprep.subr.mxu0 0.0
    %226 = vmatpush2.msra.mxu0 0.0
    %227 = vmatprep.subr.mxu0 0.0
    %228 = vmatpush2.msra.mxu0 0.0
    %229 = vmatprep.subr.mxu0 0.0
    %230 = vmatpush2.msra.mxu0 0.0
    %231 = vmatprep.subr.mxu0 0.0
    %232 = vmatpush2.msra.mxu0 0.0
    %233 = vmatprep.subr.mxu0 0.0
    %234 = vmatpush2.msra.mxu0 0.0
    %235 = vmatprep.subr.mxu0 0.0
    %236 = vmatpush2.msra.mxu0 0.0
    %237 = vmatprep.subr.mxu0 0.0
    %238 = vmatpush2.msra.mxu0 0.0
    %239 = vmatprep.subr.mxu0 0.0
    %240 = vmatpush2.msra.mxu0 0.0
    %241 = vmatprep.subr.mxu0 0.0
    %242 = vmatpush2.msra.mxu0 0.0
    %243 = vmatprep.subr.mxu0 0.0
    %244 = vmatpush2.msra.mxu0 0.0
    %245 = vmatprep.subr.mxu0 0.0
    %246 = vmatpush2.msra.mxu0 0.0
    %247 = vmatprep.mubr.f32.mxu0 0.0
    %248 = vmatmul.mubr.f32.gmra.mxu0 %v97
    %v249 = vpop.f32.mrf.mxu0
    %v250 = vadd.f32 0.0, %v249
    %v251 = vpop.f32.mrf.mxu0
    %252 = vmatprep.mubr.f32.mxu0 0.0
    %253 = vmatmul.mubr.f32.gmra.mxu0 %v100
    %v254 = vpop.f32.mrf.mxu0
    %v255 = vadd.f32 0.0, %v254
    %v256 = vpop.f32.mrf.mxu0
    %257 = vdwg.mxu0
    %v258 = vld [vmem:[#allocation8] sm:$0xff]
    %v259 = vld [vmem:[#allocation8 + $0x8] sm:$0xff]
    %v260 = vld [vmem:[#allocation8 + $0x10] sm:$0xff]
    %v261 = vld [vmem:[#allocation8 + $0x18] sm:$0xff]
    %262 = vmatprep.subr.mxu0 0.0
    %263 = vmatpush1.msra.mxu0 0.0
    %264 = vmatprep.subr.mxu0 0.0
    %265 = vmatpush1.msra.mxu0 0.0
    %266 = vmatprep.subr.mxu0 0.0
    %267 = vmatpush1.msra.mxu0 0.0
    %268 = vmatprep.subr.mxu0 0.0
    %269 = vmatpush1.msra.mxu0 0.0
    %270 = vmatprep.subr.mxu0 0.0
    %271 = vmatpush1.msra.mxu0 0.0
    %272 = vmatprep.subr.mxu0 0.0
    %273 = vmatpush1.msra.mxu0 0.0
    %274 = vmatprep.subr.mxu0 0.0
    %275 = vmatpush1.msra.mxu0 0.0
    %276 = vmatprep.subr.mxu0 0.0
    %277 = vmatpush1.msra.mxu0 0.0
    %278 = vmatprep.subr.mxu0 0.0
    %279 = vmatpush1.msra.mxu0 0.0
    %280 = vmatprep.subr.mxu0 0.0
    %281 = vmatpush1.msra.mxu0 0.0
    %282 = vmatprep.subr.mxu0 0.0
    %283 = vmatpush1.msra.mxu0 0.0
    %284 = vmatprep.subr.mxu0 0.0
    %285 = vmatpush1.msra.mxu0 0.0
    %286 = vmatprep.subr.mxu0 0.0
    %287 = vmatpush1.msra.mxu0 %v261
    %288 = vmatprep.subr.mxu0 0.0
    %289 = vmatpush1.msra.mxu0 %v260
    %290 = vmatprep.subr.mxu0 0.0
    %291 = vmatpush1.msra.mxu0 %v259
    %292 = vmatprep.subr.mxu0 0.0
    %293 = vmatpush1.msra.mxu0 %v258
    %294 = vmatprep.subr.mxu0 0.0
    %295 = vmatpush2.msra.mxu0 0.0
    %296 = vmatprep.subr.mxu0 0.0
    %297 = vmatpush2.msra.mxu0 0.0
    %298 = vmatprep.subr.mxu0 0.0
    %299 = vmatpush2.msra.mxu0 0.0
    %300 = vmatprep.subr.mxu0 0.0
    %301 = vmatpush2.msra.mxu0 0.0
    %302 = vmatprep.subr.mxu0 0.0
    %303 = vmatpush2.msra.mxu0 0.0
    %304 = vmatprep.subr.mxu0 0.0
    %305 = vmatpush2.msra.mxu0 0.0
    %306 = vmatprep.subr.mxu0 0.0
    %307 = vmatpush2.msra.mxu0 0.0
    %308 = vmatprep.subr.mxu0 0.0
    %309 = vmatpush2.msra.mxu0 0.0
    %310 = vmatprep.subr.mxu0 0.0
    %311 = vmatpush2.msra.mxu0 0.0
    %312 = vmatprep.subr.mxu0 0.0
    %313 = vmatpush2.msra.mxu0 0.0
    %314 = vmatprep.subr.mxu0 0.0
    %315 = vmatpush2.msra.mxu0 0.0
    %316 = vmatprep.subr.mxu0 0.0
    %317 = vmatpush2.msra.mxu0 0.0
    %318 = vmatprep.subr.mxu0 0.0
    %319 = vmatpush2.msra.mxu0 0.0
    %320 = vmatprep.subr.mxu0 0.0
    %321 = vmatpush2.msra.mxu0 0.0
    %322 = vmatprep.subr.mxu0 0.0
    %323 = vmatpush2.msra.mxu0 0.0
    %324 = vmatprep.subr.mxu0 0.0
    %325 = vmatpush2.msra.mxu0 0.0
    %326 = vmatprep.mubr.f32.mxu0 0.0
    %327 = vmatmul.mubr.f32.gmra.mxu0 %v97
    %v328 = vpop.f32.mrf.mxu0
    %v329 = vadd.f32 0.0, %v328
    %v330 = vpop.f32.mrf.mxu0
    %331 = vmatprep.mubr.f32.mxu0 0.0
    %332 = vmatmul.mubr.f32.gmra.mxu0 %v100
    %v333 = vpop.f32.mrf.mxu0
    %v334 = vadd.f32 0.0, %v333
    %v335 = vpop.f32.mrf.mxu0
    %336 = vdwg.mxu0
    %v338 = vsel %vm95, %v177, 0
    %v341 = vsel %vm95, %v250, 0
    %343 = vmatprep.subr.mxu0 0.0
    %344 = vmatpush1.xpose.msra.mxu0 0.0
    %345 = vmatprep.subr.mxu0 0.0
    %346 = vmatpush1.xpose.msra.mxu0 0.0
    %347 = vmatprep.subr.mxu0 0.0
    %348 = vmatpush1.xpose.msra.mxu0 0.0
    %349 = vmatprep.subr.mxu0 0.0
    %350 = vmatpush1.xpose.msra.mxu0 0.0
    %351 = vmatprep.subr.mxu0 0.0
    %352 = vmatpush1.xpose.msra.mxu0 0.0
    %353 = vmatprep.subr.mxu0 0.0
    %354 = vmatpush1.xpose.msra.mxu0 0.0
    %355 = vmatprep.subr.mxu0 0.0
    %356 = vmatpush1.xpose.msra.mxu0 0.0
    %357 = vmatprep.subr.mxu0 0.0
    %358 = vmatpush1.xpose.msra.mxu0 0.0
    %359 = vmatprep.subr.mxu0 0.0
    %360 = vmatpush1.xpose.msra.mxu0 0.0
    %361 = vmatprep.subr.mxu0 0.0
    %362 = vmatpush1.xpose.msra.mxu0 0.0
    %363 = vmatprep.subr.mxu0 0.0
    %364 = vmatpush1.xpose.msra.mxu0 0.0
    %365 = vmatprep.subr.mxu0 0.0
    %366 = vmatpush1.xpose.msra.mxu0 0.0
    %367 = vmatprep.subr.mxu0 0.0
    %368 = vmatpush1.xpose.msra.mxu0 0.0
    %369 = vmatprep.subr.mxu0 0.0
    %370 = vmatpush1.xpose.msra.mxu0 0.0
    %371 = vmatprep.subr.mxu0 0.0
    %372 = vmatpush1.xpose.msra.mxu0 0.0
    %373 = vmatprep.subr.mxu0 0.0
    %374 = vmatpush1.xpose.msra.mxu0 %v341
    %375 = vmatprep.subr.mxu0 0.0
    %376 = vmatpush2.xpose.msra.mxu0 0.0
    %377 = vmatprep.subr.mxu0 0.0
    %378 = vmatpush2.xpose.msra.mxu0 0.0
    %379 = vmatprep.subr.mxu0 0.0
    %380 = vmatpush2.xpose.msra.mxu0 0.0
    %381 = vmatprep.subr.mxu0 0.0
    %382 = vmatpush2.xpose.msra.mxu0 0.0
    %383 = vmatprep.subr.mxu0 0.0
    %384 = vmatpush2.xpose.msra.mxu0 0.0
    %385 = vmatprep.subr.mxu0 0.0
    %386 = vmatpush2.xpose.msra.mxu0 0.0
    %387 = vmatprep.subr.mxu0 0.0
    %388 = vmatpush2.xpose.msra.mxu0 0.0
    %389 = vmatprep.subr.mxu0 0.0
    %390 = vmatpush2.xpose.msra.mxu0 0.0
    %391 = vmatprep.subr.mxu0 0.0
    %392 = vmatpush2.xpose.msra.mxu0 0.0
    %393 = vmatprep.subr.mxu0 0.0
    %394 = vmatpush2.xpose.msra.mxu0 0.0
    %395 = vmatprep.subr.mxu0 0.0
    %396 = vmatpush2.xpose.msra.mxu0 0.0
    %397 = vmatprep.subr.mxu0 0.0
    %398 = vmatpush2.xpose.msra.mxu0 0.0
    %399 = vmatprep.subr.mxu0 0.0
    %400 = vmatpush2.xpose.msra.mxu0 0.0
    %401 = vmatprep.subr.mxu0 0.0
    %402 = vmatpush2.xpose.msra.mxu0 0.0
    %403 = vmatprep.subr.mxu0 0.0
    %404 = vmatpush2.xpose.msra.mxu0 0.0
    %405 = vmatprep.subr.mxu0 0.0
    %406 = vmatpush2.xpose.msra.mxu0 0.0
    %407 = vmatprep.mubr.f32.mxu0 0.0
    %408 = vmatmul.mubr.f32.gmra.mxu0 %v338
    %v409 = vpop.f32.mrf.mxu0
    %v410 = vadd.f32 0.0, %v409
    %v411 = vpop.f32.mrf.mxu0
    %412 = vdwg.mxu0
    %v414 = vsel %vm95, %v178, 0
    %v417 = vsel %vm95, %v255, 0
    %419 = vmatprep.subr.mxu0 0.0
    %420 = vmatpush1.xpose.msra.mxu0 0.0
    %421 = vmatprep.subr.mxu0 0.0
    %422 = vmatpush1.xpose.msra.mxu0 0.0
    %423 = vmatprep.subr.mxu0 0.0
    %424 = vmatpush1.xpose.msra.mxu0 0.0
    %425 = vmatprep.subr.mxu0 0.0
    %426 = vmatpush1.xpose.msra.mxu0 0.0
    %427 = vmatprep.subr.mxu0 0.0
    %428 = vmatpush1.xpose.msra.mxu0 0.0
    %429 = vmatprep.subr.mxu0 0.0
    %430 = vmatpush1.xpose.msra.mxu0 0.0
    %431 = vmatprep.subr.mxu0 0.0
    %432 = vmatpush1.xpose.msra.mxu0 0.0
    %433 = vmatprep.subr.mxu0 0.0
    %434 = vmatpush1.xpose.msra.mxu0 0.0
    %435 = vmatprep.subr.mxu0 0.0
    %436 = vmatpush1.xpose.msra.mxu0 0.0
    %437 = vmatprep.subr.mxu0 0.0
    %438 = vmatpush1.xpose.msra.mxu0 0.0
    %439 = vmatprep.subr.mxu0 0.0
    %440 = vmatpush1.xpose.msra.mxu0 0.0
    %441 = vmatprep.subr.mxu0 0.0
    %442 = vmatpush1.xpose.msra.mxu0 0.0
    %443 = vmatprep.subr.mxu0 0.0
    %444 = vmatpush1.xpose.msra.mxu0 0.0
    %445 = vmatprep.subr.mxu0 0.0
    %446 = vmatpush1.xpose.msra.mxu0 0.0
    %447 = vmatprep.subr.mxu0 0.0
    %448 = vmatpush1.xpose.msra.mxu0 0.0
    %449 = vmatprep.subr.mxu0 0.0
    %450 = vmatpush1.xpose.msra.mxu0 %v417
    %451 = vmatprep.subr.mxu0 0.0
    %452 = vmatpush2.xpose.msra.mxu0 0.0
    %453 = vmatprep.subr.mxu0 0.0
    %454 = vmatpush2.xpose.msra.mxu0 0.0
    %455 = vmatprep.subr.mxu0 0.0
    %456 = vmatpush2.xpose.msra.mxu0 0.0
    %457 = vmatprep.subr.mxu0 0.0
    %458 = vmatpush2.xpose.msra.mxu0 0.0
    %459 = vmatprep.subr.mxu0 0.0
    %460 = vmatpush2.xpose.msra.mxu0 0.0
    %461 = vmatprep.subr.mxu0 0.0
    %462 = vmatpush2.xpose.msra.mxu0 0.0
    %463 = vmatprep.subr.mxu0 0.0
    %464 = vmatpush2.xpose.msra.mxu0 0.0
    %465 = vmatprep.subr.mxu0 0.0
    %466 = vmatpush2.xpose.msra.mxu0 0.0
    %467 = vmatprep.subr.mxu0 0.0
    %468 = vmatpush2.xpose.msra.mxu0 0.0
    %469 = vmatprep.subr.mxu0 0.0
    %470 = vmatpush2.xpose.msra.mxu0 0.0
    %471 = vmatprep.subr.mxu0 0.0
    %472 = vmatpush2.xpose.msra.mxu0 0.0
    %473 = vmatprep.subr.mxu0 0.0
    %474 = vmatpush2.xpose.msra.mxu0 0.0
    %475 = vmatprep.subr.mxu0 0.0
    %476 = vmatpush2.xpose.msra.mxu0 0.0
    %477 = vmatprep.subr.mxu0 0.0
    %478 = vmatpush2.xpose.msra.mxu0 0.0
    %479 = vmatprep.subr.mxu0 0.0
    %480 = vmatpush2.xpose.msra.mxu0 0.0
    %481 = vmatprep.subr.mxu0 0.0
    %482 = vmatpush2.xpose.msra.mxu0 0.0
    %483 = vmatprep.mubr.f32.mxu0 0.0
    %484 = vmatmul.mubr.f32.gmra.mxu0 %v414
    %v485 = vpop.f32.mrf.mxu0
    %v486 = vadd.f32 0.0, %v485
    %v487 = vpop.f32.mrf.mxu0
    %488 = vdwg.mxu0
    %vm489 = vcmask 64512
    %v490 = vsel %vm489, %v410, -inf
    %491 = vmax.xlane.f32.xlu0 %v490
    %v492 = vpop.xlane.xlu0 %491
    %v493 = vsel %vm489, %v486, -inf
    %494 = vmax.xlane.f32.xlu0 %v493
    %v495 = vpop.xlane.xlu0 %494
    %v496 = vsub.f32 %v410, %v492
    %v497 = vsub.f32 %v486, %v495
    %v498 = vmul.f32 %v496, 1.442695
    %v499 = vpow.pop %v498
    %v500 = vmul.f32 %v497, 1.442695
    %v501 = vpow.pop %v500
    %v502 = vsel %vm489, %v499, 0.0
    %503 = vadd.xlane.f32.xlu0 %v502
    %v504 = vpop.xlane.xlu0 %503
    %v505 = vsel %vm489, %v501, 0.0
    %506 = vadd.xlane.f32.xlu0 %v505
    %v507 = vpop.xlane.xlu0 %506
    %v509 = vsel %vm489, %v499, 0
    %511 = vmatprep.subr.mxu0 0.0
    %512 = vmatpush1.msra.mxu0 0.0
    %513 = vmatprep.subr.mxu0 0.0
    %514 = vmatpush1.msra.mxu0 0.0
    %515 = vmatprep.subr.mxu0 0.0
    %516 = vmatpush1.msra.mxu0 0.0
    %517 = vmatprep.subr.mxu0 0.0
    %518 = vmatpush1.msra.mxu0 0.0
    %519 = vmatprep.subr.mxu0 0.0
    %520 = vmatpush1.msra.mxu0 0.0
    %521 = vmatprep.subr.mxu0 0.0
    %522 = vmatpush1.msra.mxu0 0.0
    %523 = vmatprep.subr.mxu0 0.0
    %524 = vmatpush1.msra.mxu0 0.0
    %525 = vmatprep.subr.mxu0 0.0
    %526 = vmatpush1.msra.mxu0 0.0
    %527 = vmatprep.subr.mxu0 0.0
    %528 = vmatpush1.msra.mxu0 0.0
    %529 = vmatprep.subr.mxu0 0.0
    %530 = vmatpush1.msra.mxu0 0.0
    %531 = vmatprep.subr.mxu0 0.0
    %532 = vmatpush1.msra.mxu0 0.0
    %533 = vmatprep.subr.mxu0 0.0
    %534 = vmatpush1.msra.mxu0 0.0
    %535 = vmatprep.subr.mxu0 0.0
    %536 = vmatpush1.msra.mxu0 0.0
    %537 = vmatprep.subr.mxu0 0.0
    %538 = vmatpush1.msra.mxu0 0.0
    %539 = vmatprep.subr.mxu0 0.0
    %540 = vmatpush1.msra.mxu0 0.0
    %541 = vmatprep.subr.mxu0 0.0
    %542 = vmatpush1.msra.mxu0 %v329
    %543 = vmatprep.subr.mxu0 0.0
    %544 = vmatpush2.msra.mxu0 0.0
    %545 = vmatprep.subr.mxu0 0.0
    %546 = vmatpush2.msra.mxu0 0.0
    %547 = vmatprep.subr.mxu0 0.0
    %548 = vmatpush2.msra.mxu0 0.0
    %549 = vmatprep.subr.mxu0 0.0
    %550 = vmatpush2.msra.mxu0 0.0
    %551 = vmatprep.subr.mxu0 0.0
    %552 = vmatpush2.msra.mxu0 0.0
    %553 = vmatprep.subr.mxu0 0.0
    %554 = vmatpush2.msra.mxu0 0.0
    %555 = vmatprep.subr.mxu0 0.0
    %556 = vmatpush2.msra.mxu0 0.0
    %557 = vmatprep.subr.mxu0 0.0
    %558 = vmatpush2.msra.mxu0 0.0
    %559 = vmatprep.subr.mxu0 0.0
    %560 = vmatpush2.msra.mxu0 0.0
    %561 = vmatprep.subr.mxu0 0.0
    %562 = vmatpush2.msra.mxu0 0.0
    %563 = vmatprep.subr.mxu0 0.0
    %564 = vmatpush2.msra.mxu0 0.0
    %565 = vmatprep.subr.mxu0 0.0
    %566 = vmatpush2.msra.mxu0 0.0
    %567 = vmatprep.subr.mxu0 0.0
    %568 = vmatpush2.msra.mxu0 0.0
    %569 = vmatprep.subr.mxu0 0.0
    %570 = vmatpush2.msra.mxu0 0.0
    %571 = vmatprep.subr.mxu0 0.0
    %572 = vmatpush2.msra.mxu0 0.0
    %573 = vmatprep.subr.mxu0 0.0
    %574 = vmatpush2.msra.mxu0 0.0
    %575 = vmatprep.mubr.f32.mxu0 0.0
    %576 = vmatmul.mubr.f32.gmra.mxu0 %v509
    %v577 = vpop.f32.mrf.mxu0
    %v578 = vadd.f32 0.0, %v577
    %v579 = vpop.f32.mrf.mxu0
    %580 = vdwg.mxu0
    %v582 = vsel %vm489, %v501, 0
    %584 = vmatprep.subr.mxu0 0.0
    %585 = vmatpush1.msra.mxu0 0.0
    %586 = vmatprep.subr.mxu0 0.0
    %587 = vmatpush1.msra.mxu0 0.0
    %588 = vmatprep.subr.mxu0 0.0
    %589 = vmatpush1.msra.mxu0 0.0
    %590 = vmatprep.subr.mxu0 0.0
    %591 = vmatpush1.msra.mxu0 0.0
    %592 = vmatprep.subr.mxu0 0.0
    %593 = vmatpush1.msra.mxu0 0.0
    %594 = vmatprep.subr.mxu0 0.0
    %595 = vmatpush1.msra.mxu0 0.0
    %596 = vmatprep.subr.mxu0 0.0
    %597 = vmatpush1.msra.mxu0 0.0
    %598 = vmatprep.subr.mxu0 0.0
    %599 = vmatpush1.msra.mxu0 0.0
    %600 = vmatprep.subr.mxu0 0.0
    %601 = vmatpush1.msra.mxu0 0.0
    %602 = vmatprep.subr.mxu0 0.0
    %603 = vmatpush1.msra.mxu0 0.0
    %604 = vmatprep.subr.mxu0 0.0
    %605 = vmatpush1.msra.mxu0 0.0
    %606 = vmatprep.subr.mxu0 0.0
    %607 = vmatpush1.msra.mxu0 0.0
    %608 = vmatprep.subr.mxu0 0.0
    %609 = vmatpush1.msra.mxu0 0.0
    %610 = vmatprep.subr.mxu0 0.0
    %611 = vmatpush1.msra.mxu0 0.0
    %612 = vmatprep.subr.mxu0 0.0
    %613 = vmatpush1.msra.mxu0 0.0
    %614 = vmatprep.subr.mxu0 0.0
    %615 = vmatpush1.msra.mxu0 %v334
    %616 = vmatprep.subr.mxu0 0.0
    %617 = vmatpush2.msra.mxu0 0.0
    %618 = vmatprep.subr.mxu0 0.0
    %619 = vmatpush2.msra.mxu0 0.0
    %620 = vmatprep.subr.mxu0 0.0
    %621 = vmatpush2.msra.mxu0 0.0
    %622 = vmatprep.subr.mxu0 0.0
    %623 = vmatpush2.msra.mxu0 0.0
    %624 = vmatprep.subr.mxu0 0.0
    %625 = vmatpush2.msra.mxu0 0.0
    %626 = vmatprep.subr.mxu0 0.0
    %627 = vmatpush2.msra.mxu0 0.0
    %628 = vmatprep.subr.mxu0 0.0
    %629 = vmatpush2.msra.mxu0 0.0
    %630 = vmatprep.subr.mxu0 0.0
    %631 = vmatpush2.msra.mxu0 0.0
    %632 = vmatprep.subr.mxu0 0.0
    %633 = vmatpush2.msra.mxu0 0.0
    %634 = vmatprep.subr.mxu0 0.0
    %635 = vmatpush2.msra.mxu0 0.0
    %636 = vmatprep.subr.mxu0 0.0
    %637 = vmatpush2.msra.mxu0 0.0
    %638 = vmatprep.subr.mxu0 0.0
    %639 = vmatpush2.msra.mxu0 0.0
    %640 = vmatprep.subr.mxu0 0.0
    %641 = vmatpush2.msra.mxu0 0.0
    %642 = vmatprep.subr.mxu0 0.0
    %643 = vmatpush2.msra.mxu0 0.0
    %644 = vmatprep.subr.mxu0 0.0
    %645 = vmatpush2.msra.mxu0 0.0
    %646 = vmatprep.subr.mxu0 0.0
    %647 = vmatpush2.msra.mxu0 0.0
    %648 = vmatprep.mubr.f32.mxu0 0.0
    %649 = vmatmul.mubr.f32.gmra.mxu0 %v582
    %v650 = vpop.f32.mrf.mxu0
    %v651 = vadd.f32 0.0, %v650
    %v652 = vpop.f32.mrf.mxu0
    %653 = vdwg.mxu0
    %v654 = vrcp.pop %v504
    %v655 = vrcp.pop %v507
    %v656 = vmul.f32 %v578, %v654
    %v657 = vmul.f32 %v651, %v655
    %v658 = vld [vmem:[#allocation10] sm:$0xff]
    %v659 = vld [vmem:[#allocation10 + $0x8] sm:$0xff]
    %v660 = vld [vmem:[#allocation10 + $0x10] sm:$0xff]
    %v661 = vld [vmem:[#allocation10 + $0x18] sm:$0xff]
    %v663 = vsel %vm95, %v656, 0
    %v666 = vsel %vm95, %v657, 0
    %668 = vmatprep.subr.mxu0 0.0
    %669 = vmatpush1.msra.mxu0 0.0
    %670 = vmatprep.subr.mxu0 0.0
    %671 = vmatpush1.msra.mxu0 0.0
    %672 = vmatprep.subr.mxu0 0.0
    %673 = vmatpush1.msra.mxu0 0.0
    %674 = vmatprep.subr.mxu0 0.0
    %675 = vmatpush1.msra.mxu0 0.0
    %676 = vmatprep.subr.mxu0 0.0
    %677 = vmatpush1.msra.mxu0 0.0
    %678 = vmatprep.subr.mxu0 0.0
    %679 = vmatpush1.msra.mxu0 0.0
    %680 = vmatprep.subr.mxu0 0.0
    %681 = vmatpush1.msra.mxu0 0.0
    %682 = vmatprep.subr.mxu0 0.0
    %683 = vmatpush1.msra.mxu0 0.0
    %684 = vmatprep.subr.mxu0 0.0
    %685 = vmatpush1.msra.mxu0 0.0
    %686 = vmatprep.subr.mxu0 0.0
    %687 = vmatpush1.msra.mxu0 0.0
    %688 = vmatprep.subr.mxu0 0.0
    %689 = vmatpush1.msra.mxu0 0.0
    %690 = vmatprep.subr.mxu0 0.0
    %691 = vmatpush1.msra.mxu0 0.0
    %692 = vmatprep.subr.mxu0 0.0
    %693 = vmatpush1.msra.mxu0 %v661
    %694 = vmatprep.subr.mxu0 0.0
    %695 = vmatpush1.msra.mxu0 %v660
    %696 = vmatprep.subr.mxu0 0.0
    %697 = vmatpush1.msra.mxu0 %v659
    %698 = vmatprep.subr.mxu0 0.0
    %699 = vmatpush1.msra.mxu0 %v658
    %700 = vmatprep.subr.mxu0 0.0
    %701 = vmatpush2.msra.mxu0 0.0
    %702 = vmatprep.subr.mxu0 0.0
    %703 = vmatpush2.msra.mxu0 0.0
    %704 = vmatprep.subr.mxu0 0.0
    %705 = vmatpush2.msra.mxu0 0.0
    %706 = vmatprep.subr.mxu0 0.0
    %707 = vmatpush2.msra.mxu0 0.0
    %708 = vmatprep.subr.mxu0 0.0
    %709 = vmatpush2.msra.mxu0 0.0
    %710 = vmatprep.subr.mxu0 0.0
    %711 = vmatpush2.msra.mxu0 0.0
    %712 = vmatprep.subr.mxu0 0.0
    %713 = vmatpush2.msra.mxu0 0.0
    %714 = vmatprep.subr.mxu0 0.0
    %715 = vmatpush2.msra.mxu0 0.0
    %716 = vmatprep.subr.mxu0 0.0
    %717 = vmatpush2.msra.mxu0 0.0
    %718 = vmatprep.subr.mxu0 0.0
    %719 = vmatpush2.msra.mxu0 0.0
    %720 = vmatprep.subr.mxu0 0.0
    %721 = vmatpush2.msra.mxu0 0.0
    %722 = vmatprep.subr.mxu0 0.0
    %723 = vmatpush2.msra.mxu0 0.0
    %724 = vmatprep.subr.mxu0 0.0
    %725 = vmatpush2.msra.mxu0 0.0
    %726 = vmatprep.subr.mxu0 0.0
    %727 = vmatpush2.msra.mxu0 0.0
    %728 = vmatprep.subr.mxu0 0.0
    %729 = vmatpush2.msra.mxu0 0.0
    %730 = vmatprep.subr.mxu0 0.0
    %731 = vmatpush2.msra.mxu0 0.0
    %732 = vmatprep.mubr.f32.mxu0 0.0
    %733 = vmatmul.mubr.f32.gmra.mxu0 %v663
    %v734 = vpop.f32.mrf.mxu0
    %v735 = vadd.f32 0.0, %v734
    %v736 = vpop.f32.mrf.mxu0
    %737 = vmatprep.mubr.f32.mxu0 0.0
    %738 = vmatmul.mubr.f32.gmra.mxu0 %v666
    %v739 = vpop.f32.mrf.mxu0
    %v740 = vadd.f32 0.0, %v739
    %v741 = vpop.f32.mrf.mxu0
    %742 = vdwg.mxu0
    %743 = vst.msk [vmem:[#allocation11] sm:$0xff] %vm95, %v735
    %744 = vst.msk [vmem:[#allocation11 + $0x8] sm:$0xff] %vm95, %v740
    // Predicated region
    $region42: #{tpu_custom_call.1} parent=1 // pred_check
      _
    $region43: #{tpu_custom_call.1} parent=1 // pred_check_branch
      %746 = sbr.rel (0) target = $region45
    $region44: #{tpu_custom_call.1} parent=1 // pred_region
      %s748 = ssub.s32 256, 256
      %749 = vsyncadd [#allocation4], %s748
      %s750 = sshll.u32 [#allocation11], 4
      %s751 = int_to_ptr.vmem [resolvable:$true] %s750
      %756 = dma.vmem_to_hbm [thread:$0]  %s751, 256, %s5, [#allocation4], 128, 128, 8
    $region45: #{tpu_custom_call.1} parent=1 // pred_fallthru
      _
    // Predicated region
    $region46: #{tpu_custom_call.1} parent=1 // pred_check
      _
    $region47: #{tpu_custom_call.1} parent=1 // pred_check_branch
      %758 = sbr.rel (0) target = $region49
    $region48: #{tpu_custom_call.1} parent=1 // pred_region
      %759 = dma.done [#allocation4], 256
    $region49: #{tpu_custom_call.1} parent=1 // pred_fallthru
      _
    %760 = vsyncpa [#allocation3], 1
    %761 = vsyncpa [#allocation6], 1
    %762 = vsyncpa [#allocation9], 1
    %763 = vsyncpa [#allocation4], 1

</llo_original>
